<compile_context>
chip_gen: v5e
topology: v5e:2x2
jax: 0.10.0
libtpu: 0.0.40
codegen_flags: <defaults>
</compile_context>

<pallas_src>
import functools

import jax
import jax.numpy as jnp
from jax import lax
from jax.experimental import pallas as pl
from jax.experimental.pallas import tpu as pltpu

_VMEM_LIMIT_BYTES = 32 * 1024 * 1024      # scoped-VMEM limit, safe on v5e/v6e/v7x
_VMEM_TILE_BUDGET = 24 * 1024 * 1024      # 2 inputs x 2 pipeline bufs + f32 temps + acc
_BLOCK_BYTES_TARGET = 2 * 1024 * 1024     # >= 2 MiB of input per block (amortize 0.35us/step)
_SINGLE_TILE_MAX_BYTES = 2 * 1024 * 1024  # whole-problem-in-one-VMEM-tile threshold
_LANE_WIDTHS = (4096, 2048, 1024, 512, 256, 128)  # lane-dense reshape candidates


@functools.lru_cache(maxsize=1)
def _default_num_shards() -> int:
    """TensorCores per chip: 2 on v7x, 1 on v5e/v6e.  Falls back to 1."""
    try:
        info = pltpu.get_tpu_info()
        for attr in ("num_tensorcores", "tensorcores_per_chip", "num_cores", "core_count"):
            v = getattr(info, attr, None)
            if v:
                return max(1, min(2, int(v)))
    except Exception:
        pass
    return 1


def _pick_block_rows(width: int, itemsize: int, total_rows: int) -> int:
    """Row-tile sized by a byte target, capped by the VMEM budget."""
    w_pad = ((width + 127) // 128) * 128          # lanes are padded to 128 in VMEM
    mult = 8 if itemsize >= 4 else 16             # bf16 packs 16 rows per sublane vreg
    # bytes resident per row: 2 inputs x 2 pipeline buffers + ~3 f32 temporaries
    per_row = w_pad * (4 * itemsize + 12)
    rows_budget = max(mult, _VMEM_TILE_BUDGET // per_row)
    rows_target = max(mult, _BLOCK_BYTES_TARGET // (w_pad * itemsize))
    rows = min(rows_budget, rows_target)
    rows = max(mult, (rows // mult) * mult)
    return int(rows)


def _single_tile_kernel(pred_ref, tgt_ref, out_ref, *, inv_n):
    # Whole problem in one VMEM tile: VPU diff/square, one XLU reduce, SMEM scalar out.
    diff = pred_ref[...].astype(jnp.float32) - tgt_ref[...].astype(jnp.float32)
    out_ref[0] = jnp.sum(diff * diff) * jnp.float32(inv_n)


def _tiled_kernel(pred_ref, tgt_ref, out_ref, acc_ref, *,
                  tile_rows, total_rows, steps):
    c = pl.program_id(0)          # shard axis ("parallel", -> v7x TensorCores)
    s = pl.program_id(1)          # reduction axis ("arbitrary")

    @pl.when(s == 0)
    def _():
        acc_ref[...] = jnp.zeros_like(acc_ref)

    diff = pred_ref[...].astype(jnp.float32) - tgt_ref[...].astype(jnp.float32)
    width = diff.shape[-1]

    def _fold(x):
        # (tile_rows, W) -> (8, W): splits only the sublane axis, so this stays
        # on (8,128) tile boundaries and lowers to pure VPU vreg adds.
        # TODO(synk): if a bundle dump ever shows a VMEM copy here, switch to an
        # unrolled 8-row slice-accumulate loop.
        return x.reshape(tile_rows // 8, 8, width).sum(axis=0)

    row_start = (c * steps + s) * tile_rows
    valid = total_rows - row_start            # <= 0 for clamped overhang blocks

    @pl.when(valid >= tile_rows)              # full tile: no masking cost
    def _():
        acc_ref[...] += _fold(diff * diff)

    @pl.when(valid < tile_rows)               # tail / overhang tile: row mask
    def _():
        row_ids = lax.broadcasted_iota(jnp.int32, (tile_rows, 1), 0)
        d = jnp.where(row_ids < valid, diff, 0.0)   # select (safe vs. garbage Inf/NaN)
        acc_ref[...] += _fold(d * d)

    @pl.when(s == steps - 1)                  # in-kernel finalize: per-shard scalar
    def _():
        part = jnp.sum(acc_ref[...])
        out_ref[...] = jnp.broadcast_to(part, out_ref.shape)


def gfv_loss(pred_gfv: jax.Array, target_gfv: jax.Array, *,
             num_shards: int | None = None,
             min_pallas_elements: int = 16384,
             force_pallas: bool = False) -> jax.Array:
    """Global Feature Vector loss: mean squared error over (B, latent_dim)."""
    assert pred_gfv.shape == target_gfv.shape, "pred/target shapes must match"
    assert pred_gfv.ndim == 2, "expected (B, latent_dim) inputs"
    assert pred_gfv.dtype == target_gfv.dtype, "pred/target dtypes must match"
    b, d = pred_gfv.shape
    n_total = b * d
    itemsize = jnp.dtype(pred_gfv.dtype).itemsize
    inv_n = 1.0 / n_total

    if not force_pallas and n_total < min_pallas_elements:
        # Tiny workload: XLA fusion beats pallas_call launch overhead.
        diff = pred_gfv.astype(jnp.float32) - target_gfv.astype(jnp.float32)
        return jnp.mean(diff * diff)

    # Lane-densify small / non-128-multiple latent dims (e.g. latent_dim=32):
    # free row-major reshape of the contiguous (B, D) buffer to (R, W).
    pred, tgt = pred_gfv, target_gfv
    if d % 128 != 0:
        for w_cand in _LANE_WIDTHS:
            if n_total % w_cand == 0:
                pred = pred.reshape(n_total // w_cand, w_cand)
                tgt = tgt.reshape(n_total // w_cand, w_cand)
                break
    r, w = pred.shape

    # ---------------- single-tile path ----------------
    if r < 16 or r * w * itemsize <= _SINGLE_TILE_MAX_BYTES:
        if r * w * itemsize > 4 * 1024 * 1024:
            # Pathological "a few extremely wide rows" shape: plain XLA.
            diff = pred.astype(jnp.float32) - tgt.astype(jnp.float32)
            return jnp.mean(diff * diff)
        cost = pl.CostEstimate(flops=3 * n_total, transcendentals=0,
                               bytes_accessed=2 * n_total * itemsize + 4)
        out = pl.pallas_call(
            functools.partial(_single_tile_kernel, inv_n=inv_n),
            out_shape=jax.ShapeDtypeStruct((1,), jnp.float32),
            in_specs=[pl.BlockSpec((r, w), lambda: (0, 0)),
                      pl.BlockSpec((r, w), lambda: (0, 0))],
            out_specs=pl.BlockSpec(memory_space=pltpu.SMEM),
            cost_estimate=cost,
            compiler_params=pltpu.CompilerParams(
                vmem_limit_bytes=_VMEM_LIMIT_BYTES),
        )(pred, tgt)
        return out[0]

    # ---------------- tiled / sharded path (no padding, masked tail) ----------------
    tile_rows = _pick_block_rows(w, itemsize, r)
    total_blocks = pl.cdiv(r, tile_rows)
    if num_shards is None:
        num_shards = _default_num_shards()
    num_shards = int(max(1, min(num_shards, total_blocks)))
    steps = pl.cdiv(total_blocks, num_shards)

    def in_map(c, s):
        # Clamp so overhang grid points never issue an out-of-bounds DMA; their
        # contribution is masked to zero inside the kernel.
        return (jnp.minimum(c * steps + s, total_blocks - 1), 0)

    # NOTE(v7x): if xprof still shows exposed DMA after the 2 MiB tiles, add
    # pipeline_mode=pl.Buffered(3) to these two input specs.
    in_spec = pl.BlockSpec((tile_rows, w), in_map)

    cost = pl.CostEstimate(flops=3 * n_total, transcendentals=0,
                           bytes_accessed=2 * n_total * itemsize
                           + num_shards * 8 * 128 * 4)

    partials = pl.pallas_call(
        functools.partial(_tiled_kernel, tile_rows=tile_rows, total_rows=r,
                          steps=steps),
        out_shape=jax.ShapeDtypeStruct((num_shards, 8, 128), jnp.float32),
        grid=(num_shards, steps),
        in_specs=[in_spec, in_spec],
        out_specs=pl.BlockSpec((1, 8, 128), lambda c, s: (c, 0, 0)),
        scratch_shapes=[pltpu.VMEM((8, w), jnp.float32)],
        cost_estimate=cost,
        compiler_params=pltpu.CompilerParams(
            dimension_semantics=("parallel", "arbitrary"),
            vmem_limit_bytes=_VMEM_LIMIT_BYTES),
    )(pred, tgt)

    # Per-shard scalar lives (replicated) in each shard's output slab; pick one
    # copy per shard, add num_shards scalars, divide by the TRUE element count.
    return jnp.sum(partials[:, 0, 0]) * jnp.float32(inv_n)


if __name__ == "__main__":
    key = jax.random.PRNGKey(0)
    ks = jax.random.split(key, 8)

    def ref_loss(p, t):
        return jnp.mean((p.astype(jnp.float32) - t.astype(jnp.float32)) ** 2)

    # 1) Module-scale input (B, latent_dim) = (2, 32); force the Pallas path.
    p1 = jax.random.normal(ks[0], (2, 32), dtype=jnp.float32)
    t1 = jax.random.normal(ks[1], (2, 32), dtype=jnp.float32)
    l1 = gfv_loss(p1, t1, force_pallas=True)
    jax.block_until_ready(l1)
    assert jnp.allclose(l1, ref_loss(p1, t1), rtol=1e-6, atol=1e-6), (l1, ref_loss(p1, t1))

    # 2) Larger f32 input -> tiled path with a masked tail block (no padding).
    p2 = jax.random.normal(ks[2], (8208, 256), dtype=jnp.float32)
    t2 = jax.random.normal(ks[3], (8208, 256), dtype=jnp.float32)
    l2 = gfv_loss(p2, t2)
    jax.block_until_ready(l2)
    assert jnp.allclose(l2, ref_loss(p2, t2), rtol=5e-5, atol=1e-6), (l2, ref_loss(p2, t2))

    # 2b) Same data with an explicit 2-way shard axis (v7x style), including a
    #     clamped overhang block on the second shard.
    l2b = gfv_loss(p2, t2, num_shards=2)
    jax.block_until_ready(l2b)
    assert jnp.allclose(l2b, ref_loss(p2, t2), rtol=5e-5, atol=1e-6), (l2b, ref_loss(p2, t2))

    # 3) Small latent_dim (32) at scale -> lane-dense reshape + masked tail.
    p3 = jax.random.normal(ks[4], (33000, 32), dtype=jnp.float32)
    t3 = jax.random.normal(ks[5], (33000, 32), dtype=jnp.float32)
    l3 = gfv_loss(p3, t3)
    jax.block_until_ready(l3)
    assert jnp.allclose(l3, ref_loss(p3, t3), rtol=5e-5, atol=1e-6), (l3, ref_loss(p3, t3))

    # 4) bf16 ingestion: inputs stay bf16 in HBM/VMEM, upcast per tile in-kernel.
    p4 = p2.astype(jnp.bfloat16)
    t4 = t2.astype(jnp.bfloat16)
    l4 = gfv_loss(p4, t4)
    jax.block_until_ready(l4)
    assert jnp.allclose(l4, ref_loss(p4, t4), rtol=5e-5, atol=1e-6), (l4, ref_loss(p4, t4))

    print("KERNEL_OK")
</pallas_src>

<mosaic_0001>
module attributes {stable_mosaic.version = 11 : i64} {
  func.func @_single_tile_kernel(%arg0: memref<2x32xf32, #tpu.memory_space<vmem>>, %arg1: memref<2x32xf32, #tpu.memory_space<vmem>>, %arg2: memref<1xf32, #tpu.memory_space<smem>>) attributes {dimension_semantics = [], scalar_prefetch = 0 : i64, scratch_operands = 0 : i64, tpu.core_type = #tpu.core_type<tc>} {
    %c0 = arith.constant 0 : index
    %c0_0 = arith.constant 0 : index
    %0 = vector.load %arg0[%c0, %c0_0] : memref<2x32xf32, #tpu.memory_space<vmem>>, vector<2x32xf32>
    %c0_1 = arith.constant 0 : index
    %c0_2 = arith.constant 0 : index
    %1 = vector.load %arg1[%c0_1, %c0_2] : memref<2x32xf32, #tpu.memory_space<vmem>>, vector<2x32xf32>
    %2 = arith.subf %0, %1 : vector<2x32xf32>
    %3 = arith.mulf %2, %2 : vector<2x32xf32>
    %4 = vector.shape_cast %3 : vector<2x32xf32> to vector<1x2x32xf32>
    %cst = arith.constant dense<0.000000e+00> : vector<1xf32>
    %5 = vector.multi_reduction <add>, %4, %cst [1, 2] : vector<1x2x32xf32> to vector<1xf32>
    %6 = vector.shape_cast %5 : vector<1xf32> to vector<1x1x1xf32>
    %7 = vector.extract %6[0, 0, 0] : f32 from vector<1x1x1xf32>
    %cst_3 = arith.constant 1.562500e-02 : f32
    %8 = arith.mulf %7, %cst_3 : f32
    %c0_4 = arith.constant 0 : index
    %9 = memref.load %arg2[%c0_4] : memref<1xf32, #tpu.memory_space<smem>>
    memref.store %8, %arg2[%c0_4] : memref<1xf32, #tpu.memory_space<smem>>
    return
  }
}

</mosaic_0001>

<llo_original>
// kernel: tpu_custom_call.1
$region0: #{tpu_custom_call.1}
  #allocation0 [shape = 'u32[]', space=smem, size = 0x4, offset = 0x4, fixed_abs, tag = 'smem constant byte address 0x4 - core index']
  #allocation1 [shape = 'u32[72,128]{1,0:T(1,128)}', space=vmem, size = 0x9000, scoped, tag = 'internal scratch']
  %s0 = inlined_call_operand.hbm [shape: f32[2,32], index: 0, kind: input, shape index: {}]
  %s1 = inlined_call_operand.hbm [shape: f32[2,32], index: 1, kind: input, shape index: {}]
  %s2 = inlined_call_operand.hbm [shape: f32[1], index: 2, kind: output, shape index: {}]
  %s3 = sld [smem:[#allocation0]]
  $region26: #{tpu_custom_call.1} parent=0
    _
  %s5 = ssub.s32 1, %s3
  %s6 = scalar_select 0, %s5, %s3
  $region1: #{tpu_custom_call.1} parent=0
    #allocation2 [shape = 'u8[1024]{0}', space=vmem, size = 0x400, scoped, tag = 'input window, operand 0, single buffered']
    #allocation3 [shape = 's32[1]{0}', space=sflag, size = 0x4, scoped, tag = 'scoped memory for tpu_custom_call.1']
    #allocation4 [shape = 's32[1]{0}', space=sflag, size = 0x4, scoped, tag = 'scoped memory for tpu_custom_call.1']
    #allocation5 [shape = 'u8[1024]{0}', space=vmem, size = 0x400, scoped, tag = 'input window, operand 1, single buffered']
    #allocation6 [shape = 's32[1]{0}', space=sflag, size = 0x4, scoped, tag = 'scoped memory for tpu_custom_call.1']
    #allocation7 [shape = 'u8[512]{0}', space=smem, size = 0x200, scoped, tag = 'output window, operand 0, single buffered']
    %7 = vsyncpa [#allocation3], 0
    %8 = vsyncpa [#allocation6], 0
    %9 = vsyncpa [#allocation4], 0
    // Predicated region
    $region2: #{tpu_custom_call.1} parent=1 // pred_check
      _
    $region3: #{tpu_custom_call.1} parent=1 // pred_check_branch
      %11 = sbr.rel (0) target = $region5
    $region4: #{tpu_custom_call.1} parent=1 // pred_region
      %13 = vsyncadd [#allocation3], 0
      %s15 = sshll.u32 %s0, 4
      %s16 = int_to_ptr.hbm [resolvable:$true] %s15
      %s17 = sshll.u32 [#allocation2], 4
      %s18 = int_to_ptr.vmem [resolvable:$true] %s17
      %20 = dma.hbm_to_vmem [thread:$0]  %s16, 32, %s18, [#allocation3]
    $region5: #{tpu_custom_call.1} parent=1 // pred_fallthru
      _
    // Predicated region
    $region6: #{tpu_custom_call.1} parent=1 // pred_check
      _
    $region7: #{tpu_custom_call.1} parent=1 // pred_check_branch
      %22 = sbr.rel (0) target = $region9
    $region8: #{tpu_custom_call.1} parent=1 // pred_region
      %24 = vsyncadd [#allocation6], 0
      %s26 = sshll.u32 %s1, 4
      %s27 = int_to_ptr.hbm [resolvable:$true] %s26
      %s28 = sshll.u32 [#allocation5], 4
      %s29 = int_to_ptr.vmem [resolvable:$true] %s28
      %31 = dma.hbm_to_vmem [thread:$0]  %s27, 32, %s29, [#allocation6]
    $region9: #{tpu_custom_call.1} parent=1 // pred_fallthru
      _
    // Predicated region
    $region10: #{tpu_custom_call.1} parent=1 // pred_check
      _
    $region11: #{tpu_custom_call.1} parent=1 // pred_check_branch
      %33 = sbr.rel (0) target = $region13
    $region12: #{tpu_custom_call.1} parent=1 // pred_region
      %35 = dma.done [#allocation3], 32
    $region13: #{tpu_custom_call.1} parent=1 // pred_fallthru
      _
    // Predicated region
    $region14: #{tpu_custom_call.1} parent=1 // pred_check
      _
    $region15: #{tpu_custom_call.1} parent=1 // pred_check_branch
      %37 = sbr.rel (0) target = $region17
    $region16: #{tpu_custom_call.1} parent=1 // pred_region
      %39 = dma.done [#allocation6], 32
    $region17: #{tpu_custom_call.1} parent=1 // pred_fallthru
      _
    %v40 = vld [vmem:[#allocation2] sm:$0x3]
    %v41 = vld [vmem:[#allocation5] sm:$0x3]
    %v42 = vsub.f32 %v40, %v41
    %v43 = vmul.f32 %v42, %v42
    %vm44 = vcmask 254976
    %v45 = vsel %vm44, %v43, 0.0
    %46 = vadd.xlane.f32.xlu0 %v45
    %v47 = vpop.xlane.xlu0 %46
    %v48 = vrot.slane %v47, 4
    %v49 = vadd.f32 %v47, %v48
    %v50 = vrot.slane %v49, 2
    %v51 = vadd.f32 %v49, %v50
    %v52 = vrot.slane %v51, 1
    %v53 = vadd.f32 %v51, %v52
    %s54 = vtos %v53
    %s55 = smul.f32 %s54, 0.015625
    %s56 = scalar_lea.smem [#allocation7], 0
    %57 = sst [smem:[%s56]] %s55
    // Predicated region
    $region18: #{tpu_custom_call.1} parent=1 // pred_check
      _
    $region19: #{tpu_custom_call.1} parent=1 // pred_check_branch
      %59 = sbr.rel (0) target = $region21
    $region20: #{tpu_custom_call.1} parent=1 // pred_region
      %61 = vsyncadd [#allocation4], 0
      %s63 = sshll.u32 %s2, 4
      %s64 = int_to_ptr.hbm [resolvable:$true] %s63
      %66 = dma.smem_to_hbm [#allocation7], 16, %s64, [#allocation4]
    $region21: #{tpu_custom_call.1} parent=1 // pred_fallthru
      _
    // Predicated region
    $region22: #{tpu_custom_call.1} parent=1 // pred_check
      _
    $region23: #{tpu_custom_call.1} parent=1 // pred_check_branch
      %68 = sbr.rel (0) target = $region25
    $region24: #{tpu_custom_call.1} parent=1 // pred_region
      %70 = dma.done [#allocation4], 16
    $region25: #{tpu_custom_call.1} parent=1 // pred_fallthru
      _
    %71 = sfence
    %72 = vsyncpa [#allocation3], 1
    %73 = vsyncpa [#allocation6], 1
    %74 = vsyncpa [#allocation4], 1

</llo_original>
